<compile_context>
chip_gen: v5e
topology: v5e:2x2
jax: 0.10.0
libtpu: 0.0.40
codegen_flags: <defaults>
</compile_context>

<pallas_src>
import functools
import math

import jax
import jax.numpy as jnp
from jax.experimental import pallas as pl
from jax.experimental.pallas import tpu as pltpu

# ---- module hyper-parameters (deterministic, in-script) --------------------
EMBED_DIM = 128      # embedDimension
NUM_NEURONS = 128    # numNeurons
SEQ = 8              # tokens fed to forward() in the small test
LN_EPS = 1e-5        # PyTorch nn.LayerNorm default
MAX_TILE_T = 256     # token rows per grid step (perf review: 256-512)


# ----------------------------------------------------------------------------
# Kernel 1: one-time weight prep (row-norm clip + gamma/scale fold + transpose)
# ----------------------------------------------------------------------------
def _weight_prep_kernel(w_ref, gamma_ref, wclip_ref, wt_ref, *, inv_scale):
    w = w_ref[...].astype(jnp.float32)                            # (N, D)
    norm = jnp.sqrt(jnp.sum(w * w, axis=-1, keepdims=True))       # (N, 1)
    inv_norm = 1.0 / jnp.clip(norm, 1.0, 100.0)                   # (N, 1)
    w_clipped = w * inv_norm                                      # (N, D)
    wclip_ref[...] = w_clipped.astype(wclip_ref.dtype)            # in-place W

    # Fold gamma and 1/sqrt(D) into the weights, pre-transposed to (D, N) so
    # every token tile runs the canonical (tT, D) @ (D, N) matmul with no
    # per-tile transpose and no per-tile gamma / scale VPU work.
    folded = (w_clipped * gamma_ref[...].astype(jnp.float32)) * inv_scale
    wt_ref[...] = folded.T.astype(wt_ref.dtype)                   # (D, N)


# ----------------------------------------------------------------------------
# Kernel 2: token-tiled LayerNorm -> matmul -> exact (erf) GELU
# ----------------------------------------------------------------------------
def _neuron_fwd_kernel(x_ref, wt_ref, bfold_ref, out_ref):
    x = x_ref[...].astype(jnp.float32)                            # (tT, D)
    # one-pass LayerNorm statistics (independent reductions pipeline in XLU)
    mean = jnp.mean(x, axis=-1, keepdims=True)
    mean_sq = jnp.mean(x * x, axis=-1, keepdims=True)
    var = jnp.maximum(mean_sq - mean * mean, 0.0)
    x_hat = (x - mean) * jax.lax.rsqrt(var + LN_EPS)              # (tT, D)

    # gamma/beta/bias/1/sqrt(D) are already folded into wt_ref / bfold_ref.
    raw = jnp.dot(x_hat.astype(wt_ref.dtype), wt_ref[...],
                  preferred_element_type=jnp.float32) + bfold_ref[...]  # (tT, N)

    # exact GELU (erf form, matching torch.nn.functional.gelu default)
    inv_sqrt2 = 1.0 / math.sqrt(2.0)
    out_ref[...] = (0.5 * raw * (1.0 + jax.lax.erf(raw * inv_sqrt2))
                    ).astype(out_ref.dtype)


def _choose_tile_t(t, max_tile=MAX_TILE_T):
    """Largest token tile <= max_tile dividing T (multiple of 8 when < T)."""
    if t <= max_tile:
        return t
    for cand in range(max_tile, 0, -8):        # 256, 248, ..., 8
        if t % cand == 0:
            return cand
    return t   # no multiple-of-8 divisor: fall back to one full-extent tile


def neuron_forward(x, gamma, beta, w, b, *,
                   matmul_dtype=jnp.float32, tile_t=None):
    """Returns (activated, clipped_weights).

    NOTE: the W argument's buffer is aliased with the clipped-weight output
    (mirrors PyTorch's in-place `self.n_weights.data = clippedWeights`);
    callers must not rely on `w` being unchanged after this call.
    matmul_dtype=jnp.bfloat16 feeds the MXU its native dtype on v5e/v6e/v7x
    (LN / GELU elementwise math stays f32); jnp.float32 gives bit-tight numerics.
    """
    T, D = x.shape
    N, Dw = w.shape
    assert D == Dw, "weight embed dim must match input embed dim"
    inv_scale = 1.0 / math.sqrt(D)      # derived from the actual embed dim

    gamma2 = gamma.reshape(1, D).astype(jnp.float32)
    beta2 = beta.reshape(1, D).astype(jnp.float32)
    b2 = b.reshape(1, N).astype(jnp.float32)

    # ---- one-time weight prep (outside the token grid so the token axis can
    # be "parallel" and use the second v7x TensorCore) ------------------------
    w_clipped, wt_folded = pl.pallas_call(
        functools.partial(_weight_prep_kernel, inv_scale=inv_scale),
        out_shape=(
            jax.ShapeDtypeStruct((N, D), jnp.float32),     # clipped W (aliased)
            jax.ShapeDtypeStruct((D, N), matmul_dtype),    # folded W^T
        ),
        grid=(1,),
        in_specs=[
            pl.BlockSpec((N, D), lambda i: (0, 0)),        # W
            pl.BlockSpec((1, D), lambda i: (0, 0)),        # gamma
        ],
        out_specs=(
            pl.BlockSpec((N, D), lambda i: (0, 0)),
            pl.BlockSpec((D, N), lambda i: (0, 0)),
        ),
        # W (runtime arg 0) aliases the clipped-W output (output 0): in-place
        # weight update, no separate (N, D) HBM writeback buffer.
        input_output_aliases={0: 0},
        compiler_params=pltpu.CompilerParams(
            dimension_semantics=("arbitrary",)),
    )(w, gamma2)

    # beta + bias fold: tiny (1, N) one-time op, done in plain XLA on purpose
    # (avoids an M=1 matmul inside the kernel).
    b_fold = (b2 + beta2 @ w_clipped.T) * inv_scale        # (1, N), f32

    # ---- token-tiled forward -------------------------------------------------
    if tile_t is None:
        tile_t = _choose_tile_t(T)
    assert T % tile_t == 0, "token count must be a multiple of the token tile"

    activated = pl.pallas_call(
        _neuron_fwd_kernel,
        out_shape=jax.ShapeDtypeStruct((T, N), jnp.float32),
        grid=(T // tile_t,),
        in_specs=[
            pl.BlockSpec((tile_t, D), lambda i: (i, 0)),   # x token tile
            pl.BlockSpec((D, N), lambda i: (0, 0)),        # folded W^T (resident)
            pl.BlockSpec((1, N), lambda i: (0, 0)),        # folded bias
        ],
        out_specs=pl.BlockSpec((tile_t, N), lambda i: (i, 0)),
        compiler_params=pltpu.CompilerParams(
            dimension_semantics=("parallel",)),            # token tiles independent
    )(x, wt_folded, b_fold)

    return activated, w_clipped


def neuron_forward_ref(x, gamma, beta, w, b):
    """Pure-JAX reference matching the PyTorch module."""
    w_norm = jnp.linalg.norm(w, axis=1, keepdims=True)
    w_clipped = w / jnp.clip(w_norm, 1.0, 100.0)
    mean = jnp.mean(x, axis=-1, keepdims=True)
    var = jnp.mean((x - mean) ** 2, axis=-1, keepdims=True)
    normed = (x - mean) / jnp.sqrt(var + LN_EPS) * gamma + beta
    raw = (normed @ w_clipped.T + b) / math.sqrt(x.shape[-1])
    return jax.nn.gelu(raw, approximate=False), w_clipped


if __name__ == "__main__":
    key = jax.random.PRNGKey(0)
    kx, kw, kx2, kw2, kg, kb, kbias = jax.random.split(key, 7)

    D, N = EMBED_DIM, NUM_NEURONS

    # ---- test 1: module init (gamma=1, beta=0, b=0), SEQ=8, f32 matmul ------
    x = jax.random.normal(kx, (SEQ, D), dtype=jnp.float32)
    gamma = jnp.ones((D,), dtype=jnp.float32)
    beta = jnp.zeros((D,), dtype=jnp.float32)
    n_weights = 0.01 * jax.random.normal(kw, (N, D), dtype=jnp.float32)
    n_biases = jnp.zeros((N,), dtype=jnp.float32)

    # Compute the reference FIRST: the kernel aliases (may donate) the
    # n_weights buffer, so it must not be read after the pallas_call.
    ref_act, ref_w = jax.block_until_ready(
        neuron_forward_ref(x, gamma, beta, n_weights, n_biases))
    act, w_clip = neuron_forward(x, gamma, beta, n_weights, n_biases,
                                 matmul_dtype=jnp.float32)
    jax.block_until_ready((act, w_clip))
    assert jnp.allclose(act, ref_act, atol=1e-5, rtol=1e-5)
    assert jnp.allclose(w_clip, ref_w, atol=1e-6, rtol=1e-5)

    # ---- test 2: larger T, non-trivial affine/bias, bf16 MXU operands -------
    T2 = 512
    x2 = jax.random.normal(kx2, (T2, D), dtype=jnp.float32)
    gamma_t = 1.0 + 0.1 * jax.random.normal(kg, (D,), dtype=jnp.float32)
    beta_t = 0.05 * jax.random.normal(kb, (D,), dtype=jnp.float32)
    w2 = 0.01 * jax.random.normal(kw2, (N, D), dtype=jnp.float32)
    b2 = 0.02 * jax.random.normal(kbias, (N,), dtype=jnp.float32)

    ref_act2, ref_w2 = jax.block_until_ready(
        neuron_forward_ref(x2, gamma_t, beta_t, w2, b2))
    act2, w_clip2 = neuron_forward(x2, gamma_t, beta_t, w2, b2,
                                   matmul_dtype=jnp.bfloat16)
    jax.block_until_ready((act2, w_clip2))
    assert jnp.allclose(act2, ref_act2, atol=1e-3)     # bf16 matmul operands
    assert jnp.allclose(w_clip2, ref_w2, atol=1e-6, rtol=1e-5)

    # TODO(synk): stats/history bookkeeping (rawInputHistory etc.), the
    # skipNeuron branch and COUNSELLOR/debug plumbing are host-side Python
    # state, not device compute, and are intentionally omitted.
    print("KERNEL_OK")
</pallas_src>

<mosaic_0001>
module attributes {stable_mosaic.version = 11 : i64} {
  func.func @_weight_prep_kernel(%arg0: i32, %arg1: memref<128x128xf32, #tpu.memory_space<vmem>>, %arg2: memref<1x128xf32, #tpu.memory_space<vmem>>, %arg3: memref<128x128xf32, #tpu.memory_space<vmem>>, %arg4: memref<128x128xf32, #tpu.memory_space<vmem>>) attributes {dimension_semantics = [#tpu.dimension_semantics<arbitrary>], iteration_bounds = array<i64: 1>, scalar_prefetch = 0 : i64, scratch_operands = 0 : i64, tpu.core_type = #tpu.core_type<tc>, window_params = [{pipeline_mode = #tpu.pipeline_mode<synchronous>, transform_indices = @transform_0, window_bounds = array<i64: 128, 128>}, {pipeline_mode = #tpu.pipeline_mode<synchronous>, transform_indices = @transform_1, window_bounds = array<i64: 1, 128>}, {pipeline_mode = #tpu.pipeline_mode<synchronous>, transform_indices = @transform_2, window_bounds = array<i64: 128, 128>}, {pipeline_mode = #tpu.pipeline_mode<synchronous>, transform_indices = @transform_3, window_bounds = array<i64: 128, 128>}]} {
    %c0 = arith.constant 0 : index
    %c0_0 = arith.constant 0 : index
    %0 = vector.load %arg1[%c0, %c0_0] : memref<128x128xf32, #tpu.memory_space<vmem>>, vector<128x128xf32>
    %1 = arith.mulf %0, %0 : vector<128x128xf32>
    %cst = arith.constant dense<0.000000e+00> : vector<128xf32>
    %2 = vector.multi_reduction <add>, %1, %cst [1] : vector<128x128xf32> to vector<128xf32>
    %3 = vector.shape_cast %2 : vector<128xf32> to vector<128x1xf32>
    %4 = math.sqrt %3 : vector<128x1xf32>
    %cst_1 = arith.constant 1.000000e+00 : f32
    %cst_2 = arith.constant 1.000000e+02 : f32
    %5 = vector.broadcast %cst_1 : f32 to vector<128x1xf32>
    %6 = arith.maximumf %5, %4 : vector<128x1xf32>
    %7 = vector.broadcast %cst_2 : f32 to vector<128x1xf32>
    %8 = arith.minimumf %7, %6 : vector<128x1xf32>
    %cst_3 = arith.constant 1.000000e+00 : f32
    %9 = vector.broadcast %cst_3 : f32 to vector<128x1xf32>
    %10 = arith.divf %9, %8 : vector<128x1xf32>
    %11 = vector.broadcast %10 : vector<128x1xf32> to vector<128x128xf32>
    %12 = arith.mulf %0, %11 : vector<128x128xf32>
    %c0_4 = arith.constant 0 : index
    %c0_5 = arith.constant 0 : index
    %13 = vector.load %arg3[%c0_4, %c0_5] : memref<128x128xf32, #tpu.memory_space<vmem>>, vector<128x128xf32>
    tpu.vector_store %arg3[%c0_4, %c0_5], %12 {strides = array<i32>} : memref<128x128xf32, #tpu.memory_space<vmem>>, vector<128x128xf32>,
    %c0_6 = arith.constant 0 : index
    %c0_7 = arith.constant 0 : index
    %14 = vector.load %arg2[%c0_6, %c0_7] : memref<1x128xf32, #tpu.memory_space<vmem>>, vector<1x128xf32>
    %15 = vector.broadcast %14 : vector<1x128xf32> to vector<128x128xf32>
    %16 = arith.mulf %12, %15 : vector<128x128xf32>
    %cst_8 = arith.constant 0.0883883461 : f32
    %17 = vector.broadcast %cst_8 : f32 to vector<128x128xf32>
    %18 = arith.mulf %16, %17 : vector<128x128xf32>
    %19 = tpu.transpose %18, [1, 0] : vector<128x128xf32> -> vector<128x128xf32>
    %c0_9 = arith.constant 0 : index
    %c0_10 = arith.constant 0 : index
    %20 = vector.load %arg4[%c0_9, %c0_10] : memref<128x128xf32, #tpu.memory_space<vmem>>, vector<128x128xf32>
    tpu.vector_store %arg4[%c0_9, %c0_10], %19 {strides = array<i32>} : memref<128x128xf32, #tpu.memory_space<vmem>>, vector<128x128xf32>,
    return
  }
  func.func @transform_0(%arg0: i32) -> (i32, i32) {
    %c0_i32 = arith.constant 0 : i32
    %c0_i32_0 = arith.constant 0 : i32
    %c0_i32_1 = arith.constant 0 : i32
    return %c0_i32, %c0_i32_0 : i32, i32
  }
  func.func @transform_1(%arg0: i32) -> (i32, i32) {
    %c0_i32 = arith.constant 0 : i32
    %c0_i32_0 = arith.constant 0 : i32
    %c0_i32_1 = arith.constant 0 : i32
    return %c0_i32, %c0_i32_0 : i32, i32
  }
  func.func @transform_2(%arg0: i32) -> (i32, i32) {
    %c0_i32 = arith.constant 0 : i32
    %c0_i32_0 = arith.constant 0 : i32
    %c0_i32_1 = arith.constant 0 : i32
    return %c0_i32, %c0_i32_0 : i32, i32
  }
  func.func @transform_3(%arg0: i32) -> (i32, i32) {
    %c0_i32 = arith.constant 0 : i32
    %c0_i32_0 = arith.constant 0 : i32
    %c0_i32_1 = arith.constant 0 : i32
    return %c0_i32, %c0_i32_0 : i32, i32
  }
}

</mosaic_0001>

<llo_original>
// kernel: tpu_custom_call.1
$region0: #{tpu_custom_call.1}
  #allocation0 [shape = 'u32[]', space=smem, size = 0x4, offset = 0x4, fixed_abs, tag = 'smem constant byte address 0x4 - core index']
  #allocation1 [shape = 'u32[72,128]{1,0:T(1,128)}', space=vmem, size = 0x9000, scoped, tag = 'internal scratch']
  %s0 = inlined_call_operand.hbm [shape: f32[128,128], index: 0, kind: input, shape index: {}, may-alias: {0,2}]
  %s1 = inlined_call_operand.vmem [shape: f32[1,128], index: 1, kind: input, shape index: {}]
  %s2 = inlined_call_operand.hbm [shape: f32[128,128], index: 2, kind: output, shape index: {0}, may-alias: {0,2}]
  %s3 = inlined_call_operand.hbm [shape: f32[128,128], index: 3, kind: output, shape index: {1}]
  %4 = xla_tuple %s2, %s3
  %s5 = sld [smem:[#allocation0]]
  $region30: #{tpu_custom_call.1} parent=0
    _
  %s7 = ssub.s32 1, %s5
  %s8 = scalar_select 0, %s7, %s5
  $region1: #{tpu_custom_call.1} parent=0
    #allocation2 [shape = 'u8[65536]{0}', space=vmem, size = 0x10000, scoped, tag = 'input window, operand 0, single buffered']
    #allocation3 [shape = 's32[1]{0}', space=sflag, size = 0x4, scoped, tag = 'scoped memory for tpu_custom_call.1']
    #allocation4 [shape = 's32[1]{0}', space=sflag, size = 0x4, scoped, tag = 'scoped memory for tpu_custom_call.1']
    #allocation5 [shape = 'u8[65536]{0}', space=vmem, size = 0x10000, scoped, tag = 'output window, operand 0, single buffered']
    #allocation6 [shape = 'u8[65536]{0}', space=vmem, size = 0x10000, scoped, tag = 'output window, operand 1, single buffered']
    #allocation7 [shape = 's32[1]{0}', space=sflag, size = 0x4, scoped, tag = 'scoped memory for tpu_custom_call.1']
    %9 = vsyncpa [#allocation3], 0
    %10 = vsyncpa [#allocation4], 0
    %11 = vsyncpa [#allocation7], 0
    // Predicated region
    $region2: #{tpu_custom_call.1} parent=1 // pred_check
      _
    $region3: #{tpu_custom_call.1} parent=1 // pred_check_branch
      %13 = sbr.rel (0) target = $region5
    $region4: #{tpu_custom_call.1} parent=1 // pred_region
      %15 = vsyncadd [#allocation3], 0
      %s16 = sshll.u32 %s0, 4
      %s17 = int_to_ptr.hbm [resolvable:$true] %s16
      %s18 = sshll.u32 [#allocation2], 4
      %s19 = int_to_ptr.vmem [resolvable:$true] %s18
      %24 = dma.hbm_to_vmem [thread:$0]  %s17, 2048, %s19, [#allocation3], 128, 128, 8
    $region5: #{tpu_custom_call.1} parent=1 // pred_fallthru
      _
    // Predicated region
    $region6: #{tpu_custom_call.1} parent=1 // pred_check
      _
    $region7: #{tpu_custom_call.1} parent=1 // pred_check_branch
      %26 = sbr.rel (0) target = $region9
    $region8: #{tpu_custom_call.1} parent=1 // pred_region
      _
    $region9: #{tpu_custom_call.1} parent=1 // pred_fallthru
      _
    // Predicated region
    $region10: #{tpu_custom_call.1} parent=1 // pred_check
      _
    $region11: #{tpu_custom_call.1} parent=1 // pred_check_branch
      %28 = sbr.rel (0) target = $region13
    $region12: #{tpu_custom_call.1} parent=1 // pred_region
      %30 = dma.done [#allocation3], 2048
    $region13: #{tpu_custom_call.1} parent=1 // pred_fallthru
      _
    %v31 = vld [vmem:[#allocation2] sm:$0xff]
    %v32 = vld [vmem:[#allocation2 + $0x8] sm:$0xff]
    %v33 = vld [vmem:[#allocation2 + $0x10] sm:$0xff]
    %v34 = vld [vmem:[#allocation2 + $0x18] sm:$0xff]
    %v35 = vld [vmem:[#allocation2 + $0x20] sm:$0xff]
    %v36 = vld [vmem:[#allocation2 + $0x28] sm:$0xff]
    %v37 = vld [vmem:[#allocation2 + $0x30] sm:$0xff]
    %v38 = vld [vmem:[#allocation2 + $0x38] sm:$0xff]
    %v39 = vld [vmem:[#allocation2 + $0x40] sm:$0xff]
    %v40 = vld [vmem:[#allocation2 + $0x48] sm:$0xff]
    %v41 = vld [vmem:[#allocation2 + $0x50] sm:$0xff]
    %v42 = vld [vmem:[#allocation2 + $0x58] sm:$0xff]
    %v43 = vld [vmem:[#allocation2 + $0x60] sm:$0xff]
    %v44 = vld [vmem:[#allocation2 + $0x68] sm:$0xff]
    %v45 = vld [vmem:[#allocation2 + $0x70] sm:$0xff]
    %v46 = vld [vmem:[#allocation2 + $0x78] sm:$0xff]
    %v47 = vmul.f32 %v31, %v31
    %v48 = vmul.f32 %v32, %v32
    %v49 = vmul.f32 %v33, %v33
    %v50 = vmul.f32 %v34, %v34
    %v51 = vmul.f32 %v35, %v35
    %v52 = vmul.f32 %v36, %v36
    %v53 = vmul.f32 %v37, %v37
    %v54 = vmul.f32 %v38, %v38
    %v55 = vmul.f32 %v39, %v39
    %v56 = vmul.f32 %v40, %v40
    %v57 = vmul.f32 %v41, %v41
    %v58 = vmul.f32 %v42, %v42
    %v59 = vmul.f32 %v43, %v43
    %v60 = vmul.f32 %v44, %v44
    %v61 = vmul.f32 %v45, %v45
    %v62 = vmul.f32 %v46, %v46
    %63 = vadd.xlane.f32.xlu0 %v47
    %v64 = vpop.xlane.xlu0 %63
    %65 = vadd.xlane.f32.xlu0 %v48
    %v66 = vpop.xlane.xlu0 %65
    %67 = vadd.xlane.f32.xlu0 %v49
    %v68 = vpop.xlane.xlu0 %67
    %69 = vadd.xlane.f32.xlu0 %v50
    %v70 = vpop.xlane.xlu0 %69
    %71 = vadd.xlane.f32.xlu0 %v51
    %v72 = vpop.xlane.xlu0 %71
    %73 = vadd.xlane.f32.xlu0 %v52
    %v74 = vpop.xlane.xlu0 %73
    %75 = vadd.xlane.f32.xlu0 %v53
    %v76 = vpop.xlane.xlu0 %75
    %77 = vadd.xlane.f32.xlu0 %v54
    %v78 = vpop.xlane.xlu0 %77
    %79 = vadd.xlane.f32.xlu0 %v55
    %v80 = vpop.xlane.xlu0 %79
    %81 = vadd.xlane.f32.xlu0 %v56
    %v82 = vpop.xlane.xlu0 %81
    %83 = vadd.xlane.f32.xlu0 %v57
    %v84 = vpop.xlane.xlu0 %83
    %85 = vadd.xlane.f32.xlu0 %v58
    %v86 = vpop.xlane.xlu0 %85
    %87 = vadd.xlane.f32.xlu0 %v59
    %v88 = vpop.xlane.xlu0 %87
    %89 = vadd.xlane.f32.xlu0 %v60
    %v90 = vpop.xlane.xlu0 %89
    %91 = vadd.xlane.f32.xlu0 %v61
    %v92 = vpop.xlane.xlu0 %91
    %93 = vadd.xlane.f32.xlu0 %v62
    %v94 = vpop.xlane.xlu0 %93
    %v95 = vrsqrt.pop %v64
    %v96 = vmul.f32 %v95, %v64
    %v97 = vmul.f32 %v96, %v95
    %v98 = vmul.f32 0.5, %v97
    %v99 = vsub.f32 1.5, %v98
    %v100 = vmul.f32 %v95, %v99
    %v101 = vmul.f32 %v64, %v100
    %vm102 = vcmp.eq.f32.partialorder %v64, inf
    %v103 = vsel %vm102, %v64, %v101
    %vm104 = vcmp.eq.f32.partialorder %v64, 0.0
    %v105 = vand.u32 %v64, 2147483648
    %v106 = vsel %vm104, %v105, %v103
    %v107 = vrsqrt.pop %v66
    %v108 = vmul.f32 %v107, %v66
    %v109 = vmul.f32 %v108, %v107
    %v110 = vmul.f32 0.5, %v109
    %v111 = vsub.f32 1.5, %v110
    %v112 = vmul.f32 %v107, %v111
    %v113 = vmul.f32 %v66, %v112
    %vm114 = vcmp.eq.f32.partialorder %v66, inf
    %v115 = vsel %vm114, %v66, %v113
    %vm116 = vcmp.eq.f32.partialorder %v66, 0.0
    %v117 = vand.u32 %v66, 2147483648
    %v118 = vsel %vm116, %v117, %v115
    %v119 = vrsqrt.pop %v68
    %v120 = vmul.f32 %v119, %v68
    %v121 = vmul.f32 %v120, %v119
    %v122 = vmul.f32 0.5, %v121
    %v123 = vsub.f32 1.5, %v122
    %v124 = vmul.f32 %v119, %v123
    %v125 = vmul.f32 %v68, %v124
    %vm126 = vcmp.eq.f32.partialorder %v68, inf
    %v127 = vsel %vm126, %v68, %v125
    %vm128 = vcmp.eq.f32.partialorder %v68, 0.0
    %v129 = vand.u32 %v68, 2147483648
    %v130 = vsel %vm128, %v129, %v127
    %v131 = vrsqrt.pop %v70
    %v132 = vmul.f32 %v131, %v70
    %v133 = vmul.f32 %v132, %v131
    %v134 = vmul.f32 0.5, %v133
    %v135 = vsub.f32 1.5, %v134
    %v136 = vmul.f32 %v131, %v135
    %v137 = vmul.f32 %v70, %v136
    %vm138 = vcmp.eq.f32.partialorder %v70, inf
    %v139 = vsel %vm138, %v70, %v137
    %vm140 = vcmp.eq.f32.partialorder %v70, 0.0
    %v141 = vand.u32 %v70, 2147483648
    %v142 = vsel %vm140, %v141, %v139
    %v143 = vrsqrt.pop %v72
    %v144 = vmul.f32 %v143, %v72
    %v145 = vmul.f32 %v144, %v143
    %v146 = vmul.f32 0.5, %v145
    %v147 = vsub.f32 1.5, %v146
    %v148 = vmul.f32 %v143, %v147
    %v149 = vmul.f32 %v72, %v148
    %vm150 = vcmp.eq.f32.partialorder %v72, inf
    %v151 = vsel %vm150, %v72, %v149
    %vm152 = vcmp.eq.f32.partialorder %v72, 0.0
    %v153 = vand.u32 %v72, 2147483648
    %v154 = vsel %vm152, %v153, %v151
    %v155 = vrsqrt.pop %v74
    %v156 = vmul.f32 %v155, %v74
    %v157 = vmul.f32 %v156, %v155
    %v158 = vmul.f32 0.5, %v157
    %v159 = vsub.f32 1.5, %v158
    %v160 = vmul.f32 %v155, %v159
    %v161 = vmul.f32 %v74, %v160
    %vm162 = vcmp.eq.f32.partialorder %v74, inf
    %v163 = vsel %vm162, %v74, %v161
    %vm164 = vcmp.eq.f32.partialorder %v74, 0.0
    %v165 = vand.u32 %v74, 2147483648
    %v166 = vsel %vm164, %v165, %v163
    %v167 = vrsqrt.pop %v76
    %v168 = vmul.f32 %v167, %v76
    %v169 = vmul.f32 %v168, %v167
    %v170 = vmul.f32 0.5, %v169
    %v171 = vsub.f32 1.5, %v170
    %v172 = vmul.f32 %v167, %v171
    %v173 = vmul.f32 %v76, %v172
    %vm174 = vcmp.eq.f32.partialorder %v76, inf
    %v175 = vsel %vm174, %v76, %v173
    %vm176 = vcmp.eq.f32.partialorder %v76, 0.0
    %v177 = vand.u32 %v76, 2147483648
    %v178 = vsel %vm176, %v177, %v175
    %v179 = vrsqrt.pop %v78
    %v180 = vmul.f32 %v179, %v78
    %v181 = vmul.f32 %v180, %v179
    %v182 = vmul.f32 0.5, %v181
    %v183 = vsub.f32 1.5, %v182
    %v184 = vmul.f32 %v179, %v183
    %v185 = vmul.f32 %v78, %v184
    %vm186 = vcmp.eq.f32.partialorder %v78, inf
    %v187 = vsel %vm186, %v78, %v185
    %vm188 = vcmp.eq.f32.partialorder %v78, 0.0
    %v189 = vand.u32 %v78, 2147483648
    %v190 = vsel %vm188, %v189, %v187
    %v191 = vrsqrt.pop %v80
    %v192 = vmul.f32 %v191, %v80
    %v193 = vmul.f32 %v192, %v191
    %v194 = vmul.f32 0.5, %v193
    %v195 = vsub.f32 1.5, %v194
    %v196 = vmul.f32 %v191, %v195
    %v197 = vmul.f32 %v80, %v196
    %vm198 = vcmp.eq.f32.partialorder %v80, inf
    %v199 = vsel %vm198, %v80, %v197
    %vm200 = vcmp.eq.f32.partialorder %v80, 0.0
    %v201 = vand.u32 %v80, 2147483648
    %v202 = vsel %vm200, %v201, %v199
    %v203 = vrsqrt.pop %v82
    %v204 = vmul.f32 %v203, %v82
    %v205 = vmul.f32 %v204, %v203
    %v206 = vmul.f32 0.5, %v205
    %v207 = vsub.f32 1.5, %v206
    %v208 = vmul.f32 %v203, %v207
    %v209 = vmul.f32 %v82, %v208
    %vm210 = vcmp.eq.f32.partialorder %v82, inf
    %v211 = vsel %vm210, %v82, %v209
    %vm212 = vcmp.eq.f32.partialorder %v82, 0.0
    %v213 = vand.u32 %v82, 2147483648
    %v214 = vsel %vm212, %v213, %v211
    %v215 = vrsqrt.pop %v84
    %v216 = vmul.f32 %v215, %v84
    %v217 = vmul.f32 %v216, %v215
    %v218 = vmul.f32 0.5, %v217
    %v219 = vsub.f32 1.5, %v218
    %v220 = vmul.f32 %v215, %v219
    %v221 = vmul.f32 %v84, %v220
    %vm222 = vcmp.eq.f32.partialorder %v84, inf
    %v223 = vsel %vm222, %v84, %v221
    %vm224 = vcmp.eq.f32.partialorder %v84, 0.0
    %v225 = vand.u32 %v84, 2147483648
    %v226 = vsel %vm224, %v225, %v223
    %v227 = vrsqrt.pop %v86
    %v228 = vmul.f32 %v227, %v86
    %v229 = vmul.f32 %v228, %v227
    %v230 = vmul.f32 0.5, %v229
    %v231 = vsub.f32 1.5, %v230
    %v232 = vmul.f32 %v227, %v231
    %v233 = vmul.f32 %v86, %v232
    %vm234 = vcmp.eq.f32.partialorder %v86, inf
    %v235 = vsel %vm234, %v86, %v233
    %vm236 = vcmp.eq.f32.partialorder %v86, 0.0
    %v237 = vand.u32 %v86, 2147483648
    %v238 = vsel %vm236, %v237, %v235
    %v239 = vrsqrt.pop %v88
    %v240 = vmul.f32 %v239, %v88
    %v241 = vmul.f32 %v240, %v239
    %v242 = vmul.f32 0.5, %v241
    %v243 = vsub.f32 1.5, %v242
    %v244 = vmul.f32 %v239, %v243
    %v245 = vmul.f32 %v88, %v244
    %vm246 = vcmp.eq.f32.partialorder %v88, inf
    %v247 = vsel %vm246, %v88, %v245
    %vm248 = vcmp.eq.f32.partialorder %v88, 0.0
    %v249 = vand.u32 %v88, 2147483648
    %v250 = vsel %vm248, %v249, %v247
    %v251 = vrsqrt.pop %v90
    %v252 = vmul.f32 %v251, %v90
    %v253 = vmul.f32 %v252, %v251
    %v254 = vmul.f32 0.5, %v253
    %v255 = vsub.f32 1.5, %v254
    %v256 = vmul.f32 %v251, %v255
    %v257 = vmul.f32 %v90, %v256
    %vm258 = vcmp.eq.f32.partialorder %v90, inf
    %v259 = vsel %vm258, %v90, %v257
    %vm260 = vcmp.eq.f32.partialorder %v90, 0.0
    %v261 = vand.u32 %v90, 2147483648
    %v262 = vsel %vm260, %v261, %v259
    %v263 = vrsqrt.pop %v92
    %v264 = vmul.f32 %v263, %v92
    %v265 = vmul.f32 %v264, %v263
    %v266 = vmul.f32 0.5, %v265
    %v267 = vsub.f32 1.5, %v266
    %v268 = vmul.f32 %v263, %v267
    %v269 = vmul.f32 %v92, %v268
    %vm270 = vcmp.eq.f32.partialorder %v92, inf
    %v271 = vsel %vm270, %v92, %v269
    %vm272 = vcmp.eq.f32.partialorder %v92, 0.0
    %v273 = vand.u32 %v92, 2147483648
    %v274 = vsel %vm272, %v273, %v271
    %v275 = vrsqrt.pop %v94
    %v276 = vmul.f32 %v275, %v94
    %v277 = vmul.f32 %v276, %v275
    %v278 = vmul.f32 0.5, %v277
    %v279 = vsub.f32 1.5, %v278
    %v280 = vmul.f32 %v275, %v279
    %v281 = vmul.f32 %v94, %v280
    %vm282 = vcmp.eq.f32.partialorder %v94, inf
    %v283 = vsel %vm282, %v94, %v281
    %vm284 = vcmp.eq.f32.partialorder %v94, 0.0
    %v285 = vand.u32 %v94, 2147483648
    %v286 = vsel %vm284, %v285, %v283
    %v287 = vmax.f32 %v106, 1.0
    %v288 = vmax.f32 %v118, 1.0
    %v289 = vmax.f32 %v130, 1.0
    %v290 = vmax.f32 %v142, 1.0
    %v291 = vmax.f32 %v154, 1.0
    %v292 = vmax.f32 %v166, 1.0
    %v293 = vmax.f32 %v178, 1.0
    %v294 = vmax.f32 %v190, 1.0
    %v295 = vmax.f32 %v202, 1.0
    %v296 = vmax.f32 %v214, 1.0
    %v297 = vmax.f32 %v226, 1.0
    %v298 = vmax.f32 %v238, 1.0
    %v299 = vmax.f32 %v250, 1.0
    %v300 = vmax.f32 %v262, 1.0
    %v301 = vmax.f32 %v274, 1.0
    %v302 = vmax.f32 %v286, 1.0
    %v303 = vmin.f32 %v287, 100.0
    %v304 = vmin.f32 %v288, 100.0
    %v305 = vmin.f32 %v289, 100.0
    %v306 = vmin.f32 %v290, 100.0
    %v307 = vmin.f32 %v291, 100.0
    %v308 = vmin.f32 %v292, 100.0
    %v309 = vmin.f32 %v293, 100.0
    %v310 = vmin.f32 %v294, 100.0
    %v311 = vmin.f32 %v295, 100.0
    %v312 = vmin.f32 %v296, 100.0
    %v313 = vmin.f32 %v297, 100.0
    %v314 = vmin.f32 %v298, 100.0
    %v315 = vmin.f32 %v299, 100.0
    %v316 = vmin.f32 %v300, 100.0
    %v317 = vmin.f32 %v301, 100.0
    %v318 = vmin.f32 %v302, 100.0
    %v319 = vrcp.pop %v303
    %v320 = vmul.f32 %v303, %v319
    %v321 = vsub.f32 1.0, %v320
    %v322 = vmul.f32 %v319, %v321
    %v323 = vadd.f32 %v319, %v322
    %vm324 = vweird.f32 %v303
    %vm325 = vweird.f32 %v319
    %vm326 = vmor %vm324, %vm325
    %v327 = vsel %vm326, %v319, %v323
    %v328 = vand.u32 2147483647, %v303
    %vm329 = vcmp.eq.f32.partialorder %v328, 8.507059e+37
    %v330 = vand.u32 %v303, 2147483648
    %v331 = vor.u32 1.1754944e-38, %v330
    %v332 = vsel %vm329, %v331, %v327
    %v333 = vmul.f32 1.0, %v332
    %v334 = vrcp.pop %v304
    %v335 = vmul.f32 %v304, %v334
    %v336 = vsub.f32 1.0, %v335
    %v337 = vmul.f32 %v334, %v336
    %v338 = vadd.f32 %v334, %v337
    %vm339 = vweird.f32 %v304
    %vm340 = vweird.f32 %v334
    %vm341 = vmor %vm339, %vm340
    %v342 = vsel %vm341, %v334, %v338
    %v343 = vand.u32 2147483647, %v304
    %vm344 = vcmp.eq.f32.partialorder %v343, 8.507059e+37
    %v345 = vand.u32 %v304, 2147483648
    %v346 = vor.u32 1.1754944e-38, %v345
    %v347 = vsel %vm344, %v346, %v342
    %v348 = vmul.f32 1.0, %v347
    %v349 = vrcp.pop %v305
    %v350 = vmul.f32 %v305, %v349
    %v351 = vsub.f32 1.0, %v350
    %v352 = vmul.f32 %v349, %v351
    %v353 = vadd.f32 %v349, %v352
    %vm354 = vweird.f32 %v305
    %vm355 = vweird.f32 %v349
    %vm356 = vmor %vm354, %vm355
    %v357 = vsel %vm356, %v349, %v353
    %v358 = vand.u32 2147483647, %v305
    %vm359 = vcmp.eq.f32.partialorder %v358, 8.507059e+37
    %v360 = vand.u32 %v305, 2147483648
    %v361 = vor.u32 1.1754944e-38, %v360
    %v362 = vsel %vm359, %v361, %v357
    %v363 = vmul.f32 1.0, %v362
    %v364 = vrcp.pop %v306
    %v365 = vmul.f32 %v306, %v364
    %v366 = vsub.f32 1.0, %v365
    %v367 = vmul.f32 %v364, %v366
    %v368 = vadd.f32 %v364, %v367
    %vm369 = vweird.f32 %v306
    %vm370 = vweird.f32 %v364
    %vm371 = vmor %vm369, %vm370
    %v372 = vsel %vm371, %v364, %v368
    %v373 = vand.u32 2147483647, %v306
    %vm374 = vcmp.eq.f32.partialorder %v373, 8.507059e+37
    %v375 = vand.u32 %v306, 2147483648
    %v376 = vor.u32 1.1754944e-38, %v375
    %v377 = vsel %vm374, %v376, %v372
    %v378 = vmul.f32 1.0, %v377
    %v379 = vrcp.pop %v307
    %v380 = vmul.f32 %v307, %v379
    %v381 = vsub.f32 1.0, %v380
    %v382 = vmul.f32 %v379, %v381
    %v383 = vadd.f32 %v379, %v382
    %vm384 = vweird.f32 %v307
    %vm385 = vweird.f32 %v379
    %vm386 = vmor %vm384, %vm385
    %v387 = vsel %vm386, %v379, %v383
    %v388 = vand.u32 2147483647, %v307
    %vm389 = vcmp.eq.f32.partialorder %v388, 8.507059e+37
    %v390 = vand.u32 %v307, 2147483648
    %v391 = vor.u32 1.1754944e-38, %v390
    %v392 = vsel %vm389, %v391, %v387
    %v393 = vmul.f32 1.0, %v392
    %v394 = vrcp.pop %v308
    %v395 = vmul.f32 %v308, %v394
    %v396 = vsub.f32 1.0, %v395
    %v397 = vmul.f32 %v394, %v396
    %v398 = vadd.f32 %v394, %v397
    %vm399 = vweird.f32 %v308
    %vm400 = vweird.f32 %v394
    %vm401 = vmor %vm399, %vm400
    %v402 = vsel %vm401, %v394, %v398
    %v403 = vand.u32 2147483647, %v308
    %vm404 = vcmp.eq.f32.partialorder %v403, 8.507059e+37
    %v405 = vand.u32 %v308, 2147483648
    %v406 = vor.u32 1.1754944e-38, %v405
    %v407 = vsel %vm404, %v406, %v402
    %v408 = vmul.f32 1.0, %v407
    %v409 = vrcp.pop %v309
    %v410 = vmul.f32 %v309, %v409
    %v411 = vsub.f32 1.0, %v410
    %v412 = vmul.f32 %v409, %v411
    %v413 = vadd.f32 %v409, %v412
    %vm414 = vweird.f32 %v309
    %vm415 = vweird.f32 %v409
    %vm416 = vmor %vm414, %vm415
    %v417 = vsel %vm416, %v409, %v413
    %v418 = vand.u32 2147483647, %v309
    %vm419 = vcmp.eq.f32.partialorder %v418, 8.507059e+37
    %v420 = vand.u32 %v309, 2147483648
    %v421 = vor.u32 1.1754944e-38, %v420
    %v422 = vsel %vm419, %v421, %v417
    %v423 = vmul.f32 1.0, %v422
    %v424 = vrcp.pop %v310
    %v425 = vmul.f32 %v310, %v424
    %v426 = vsub.f32 1.0, %v425
    %v427 = vmul.f32 %v424, %v426
    %v428 = vadd.f32 %v424, %v427
    %vm429 = vweird.f32 %v310
    %vm430 = vweird.f32 %v424
    %vm431 = vmor %vm429, %vm430
    %v432 = vsel %vm431, %v424, %v428
    %v433 = vand.u32 2147483647, %v310
    %vm434 = vcmp.eq.f32.partialorder %v433, 8.507059e+37
    %v435 = vand.u32 %v310, 2147483648
    %v436 = vor.u32 1.1754944e-38, %v435
    %v437 = vsel %vm434, %v436, %v432
    %v438 = vmul.f32 1.0, %v437
    %v439 = vrcp.pop %v311
    %v440 = vmul.f32 %v311, %v439
    %v441 = vsub.f32 1.0, %v440
    %v442 = vmul.f32 %v439, %v441
    %v443 = vadd.f32 %v439, %v442
    %vm444 = vweird.f32 %v311
    %vm445 = vweird.f32 %v439
    %vm446 = vmor %vm444, %vm445
    %v447 = vsel %vm446, %v439, %v443
    %v448 = vand.u32 2147483647, %v311
    %vm449 = vcmp.eq.f32.partialorder %v448, 8.507059e+37
    %v450 = vand.u32 %v311, 2147483648
    %v451 = vor.u32 1.1754944e-38, %v450
    %v452 = vsel %vm449, %v451, %v447
    %v453 = vmul.f32 1.0, %v452
    %v454 = vrcp.pop %v312
    %v455 = vmul.f32 %v312, %v454
    %v456 = vsub.f32 1.0, %v455
    %v457 = vmul.f32 %v454, %v456
    %v458 = vadd.f32 %v454, %v457
    %vm459 = vweird.f32 %v312
    %vm460 = vweird.f32 %v454
    %vm461 = vmor %vm459, %vm460
    %v462 = vsel %vm461, %v454, %v458
    %v463 = vand.u32 2147483647, %v312
    %vm464 = vcmp.eq.f32.partialorder %v463, 8.507059e+37
    %v465 = vand.u32 %v312, 2147483648
    %v466 = vor.u32 1.1754944e-38, %v465
    %v467 = vsel %vm464, %v466, %v462
    %v468 = vmul.f32 1.0, %v467
    %v469 = vrcp.pop %v313
    %v470 = vmul.f32 %v313, %v469
    %v471 = vsub.f32 1.0, %v470
    %v472 = vmul.f32 %v469, %v471
    %v473 = vadd.f32 %v469, %v472
    %vm474 = vweird.f32 %v313
    %vm475 = vweird.f32 %v469
    %vm476 = vmor %vm474, %vm475
    %v477 = vsel %vm476, %v469, %v473
    %v478 = vand.u32 2147483647, %v313
    %vm479 = vcmp.eq.f32.partialorder %v478, 8.507059e+37
    %v480 = vand.u32 %v313, 2147483648
    %v481 = vor.u32 1.1754944e-38, %v480
    %v482 = vsel %vm479, %v481, %v477
    %v483 = vmul.f32 1.0, %v482
    %v484 = vrcp.pop %v314
    %v485 = vmul.f32 %v314, %v484
    %v486 = vsub.f32 1.0, %v485
    %v487 = vmul.f32 %v484, %v486
    %v488 = vadd.f32 %v484, %v487
    %vm489 = vweird.f32 %v314
    %vm490 = vweird.f32 %v484
    %vm491 = vmor %vm489, %vm490
    %v492 = vsel %vm491, %v484, %v488
    %v493 = vand.u32 2147483647, %v314
    %vm494 = vcmp.eq.f32.partialorder %v493, 8.507059e+37
    %v495 = vand.u32 %v314, 2147483648
    %v496 = vor.u32 1.1754944e-38, %v495
    %v497 = vsel %vm494, %v496, %v492
    %v498 = vmul.f32 1.0, %v497
    %v499 = vrcp.pop %v315
    %v500 = vmul.f32 %v315, %v499
    %v501 = vsub.f32 1.0, %v500
    %v502 = vmul.f32 %v499, %v501
    %v503 = vadd.f32 %v499, %v502
    %vm504 = vweird.f32 %v315
    %vm505 = vweird.f32 %v499
    %vm506 = vmor %vm504, %vm505
    %v507 = vsel %vm506, %v499, %v503
    %v508 = vand.u32 2147483647, %v315
    %vm509 = vcmp.eq.f32.partialorder %v508, 8.507059e+37
    %v510 = vand.u32 %v315, 2147483648
    %v511 = vor.u32 1.1754944e-38, %v510
    %v512 = vsel %vm509, %v511, %v507
    %v513 = vmul.f32 1.0, %v512
    %v514 = vrcp.pop %v316
    %v515 = vmul.f32 %v316, %v514
    %v516 = vsub.f32 1.0, %v515
    %v517 = vmul.f32 %v514, %v516
    %v518 = vadd.f32 %v514, %v517
    %vm519 = vweird.f32 %v316
    %vm520 = vweird.f32 %v514
    %vm521 = vmor %vm519, %vm520
    %v522 = vsel %vm521, %v514, %v518
    %v523 = vand.u32 2147483647, %v316
    %vm524 = vcmp.eq.f32.partialorder %v523, 8.507059e+37
    %v525 = vand.u32 %v316, 2147483648
    %v526 = vor.u32 1.1754944e-38, %v525
    %v527 = vsel %vm524, %v526, %v522
    %v528 = vmul.f32 1.0, %v527
    %v529 = vrcp.pop %v317
    %v530 = vmul.f32 %v317, %v529
    %v531 = vsub.f32 1.0, %v530
    %v532 = vmul.f32 %v529, %v531
    %v533 = vadd.f32 %v529, %v532
    %vm534 = vweird.f32 %v317
    %vm535 = vweird.f32 %v529
    %vm536 = vmor %vm534, %vm535
    %v537 = vsel %vm536, %v529, %v533
    %v538 = vand.u32 2147483647, %v317
    %vm539 = vcmp.eq.f32.partialorder %v538, 8.507059e+37
    %v540 = vand.u32 %v317, 2147483648
    %v541 = vor.u32 1.1754944e-38, %v540
    %v542 = vsel %vm539, %v541, %v537
    %v543 = vmul.f32 1.0, %v542
    %v544 = vrcp.pop %v318
    %v545 = vmul.f32 %v318, %v544
    %v546 = vsub.f32 1.0, %v545
    %v547 = vmul.f32 %v544, %v546
    %v548 = vadd.f32 %v544, %v547
    %vm549 = vweird.f32 %v318
    %vm550 = vweird.f32 %v544
    %vm551 = vmor %vm549, %vm550
    %v552 = vsel %vm551, %v544, %v548
    %v553 = vand.u32 2147483647, %v318
    %vm554 = vcmp.eq.f32.partialorder %v553, 8.507059e+37
    %v555 = vand.u32 %v318, 2147483648
    %v556 = vor.u32 1.1754944e-38, %v555
    %v557 = vsel %vm554, %v556, %v552
    %v558 = vmul.f32 1.0, %v557
    %v559 = vmul.f32 %v31, %v333
    %v560 = vmul.f32 %v32, %v348
    %v561 = vmul.f32 %v33, %v363
    %v562 = vmul.f32 %v34, %v378
    %v563 = vmul.f32 %v35, %v393
    %v564 = vmul.f32 %v36, %v408
    %v565 = vmul.f32 %v37, %v423
    %v566 = vmul.f32 %v38, %v438
    %v567 = vmul.f32 %v39, %v453
    %v568 = vmul.f32 %v40, %v468
    %v569 = vmul.f32 %v41, %v483
    %v570 = vmul.f32 %v42, %v498
    %v571 = vmul.f32 %v43, %v513
    %v572 = vmul.f32 %v44, %v528
    %v573 = vmul.f32 %v45, %v543
    %v574 = vmul.f32 %v46, %v558
    %575 = vst [vmem:[#allocation5] sm:$0xff] %v559
    %576 = vst [vmem:[#allocation5 + $0x8] sm:$0xff] %v560
    %577 = vst [vmem:[#allocation5 + $0x10] sm:$0xff] %v561
    %578 = vst [vmem:[#allocation5 + $0x18] sm:$0xff] %v562
    %579 = vst [vmem:[#allocation5 + $0x20] sm:$0xff] %v563
    %580 = vst [vmem:[#allocation5 + $0x28] sm:$0xff] %v564
    %581 = vst [vmem:[#allocation5 + $0x30] sm:$0xff] %v565
    %582 = vst [vmem:[#allocation5 + $0x38] sm:$0xff] %v566
    %583 = vst [vmem:[#allocation5 + $0x40] sm:$0xff] %v567
    %584 = vst [vmem:[#allocation5 + $0x48] sm:$0xff] %v568
    %585 = vst [vmem:[#allocation5 + $0x50] sm:$0xff] %v569
    %586 = vst [vmem:[#allocation5 + $0x58] sm:$0xff] %v570
    %587 = vst [vmem:[#allocation5 + $0x60] sm:$0xff] %v571
    %588 = vst [vmem:[#allocation5 + $0x68] sm:$0xff] %v572
    %589 = vst [vmem:[#allocation5 + $0x70] sm:$0xff] %v573
    %590 = vst [vmem:[#allocation5 + $0x78] sm:$0xff] %v574
    %v591 = vld [vmem:[%s1] sm:$0x1]
    %v593 = vperm.slane %v591, 0
    %v595 = vmul.f32 %v559, %v593
    %v596 = vmul.f32 %v560, %v593
    %v597 = vmul.f32 %v561, %v593
    %v598 = vmul.f32 %v562, %v593
    %v599 = vmul.f32 %v563, %v593
    %v600 = vmul.f32 %v564, %v593
    %v601 = vmul.f32 %v565, %v593
    %v602 = vmul.f32 %v566, %v593
    %v603 = vmul.f32 %v567, %v593
    %v604 = vmul.f32 %v568, %v593
    %v605 = vmul.f32 %v569, %v593
    %v606 = vmul.f32 %v570, %v593
    %v607 = vmul.f32 %v571, %v593
    %v608 = vmul.f32 %v572, %v593
    %v609 = vmul.f32 %v573, %v593
    %v610 = vmul.f32 %v574, %v593
    %v611 = vmul.f32 %v595, 0.088388346
    %v612 = vmul.f32 %v596, 0.088388346
    %v613 = vmul.f32 %v597, 0.088388346
    %v614 = vmul.f32 %v598, 0.088388346
    %v615 = vmul.f32 %v599, 0.088388346
    %v616 = vmul.f32 %v600, 0.088388346
    %v617 = vmul.f32 %v601, 0.088388346
    %v618 = vmul.f32 %v602, 0.088388346
    %v619 = vmul.f32 %v603, 0.088388346
    %v620 = vmul.f32 %v604, 0.088388346
    %v621 = vmul.f32 %v605, 0.088388346
    %v622 = vmul.f32 %v606, 0.088388346
    %v623 = vmul.f32 %v607, 0.088388346
    %v624 = vmul.f32 %v608, 0.088388346
    %v625 = vmul.f32 %v609, 0.088388346
    %v626 = vmul.f32 %v610, 0.088388346
    %627 = vxpose.xlu0.b32.start [1/16] %v611, 128
    %628 = vxpose.xlu0.b32.cont [2/16] %v612, 128
    %629 = vxpose.xlu0.b32.cont [3/16] %v613, 128
    %630 = vxpose.xlu0.b32.cont [4/16] %v614, 128
    %631 = vxpose.xlu0.b32.cont [5/16] %v615, 128
    %632 = vxpose.xlu0.b32.cont [6/16] %v616, 128
    %633 = vxpose.xlu0.b32.cont [7/16] %v617, 128
    %634 = vxpose.xlu0.b32.cont [8/16] %v618, 128
    %635 = vxpose.xlu0.b32.cont [9/16] %v619, 128
    %636 = vxpose.xlu0.b32.cont [10/16] %v620, 128
    %637 = vxpose.xlu0.b32.cont [11/16] %v621, 128
    %638 = vxpose.xlu0.b32.cont [12/16] %v622, 128
    %639 = vxpose.xlu0.b32.cont [13/16] %v623, 128
    %640 = vxpose.xlu0.b32.cont [14/16] %v624, 128
    %641 = vxpose.xlu0.b32.cont [15/16] %v625, 128
    %642 = vxpose.xlu0.b32.end [16/16] %v626, 128
    %v643 = vpop.trf.xlu0
    %v644 = vpop.trf.xlu0
    %v645 = vpop.trf.xlu0
    %v646 = vpop.trf.xlu0
    %v647 = vpop.trf.xlu0
    %v648 = vpop.trf.xlu0
    %v649 = vpop.trf.xlu0
    %v650 = vpop.trf.xlu0
    %v651 = vpop.trf.xlu0
    %v652 = vpop.trf.xlu0
    %v653 = vpop.trf.xlu0
    %v654 = vpop.trf.xlu0
    %v655 = vpop.trf.xlu0
    %v656 = vpop.trf.xlu0
    %v657 = vpop.trf.xlu0
    %v658 = vpop.trf.xlu0
    %659 = vst [vmem:[#allocation6] sm:$0xff] %v643
    %660 = vst [vmem:[#allocation6 + $0x8] sm:$0xff] %v644
    %661 = vst [vmem:[#allocation6 + $0x10] sm:$0xff] %v645
    %662 = vst [vmem:[#allocation6 + $0x18] sm:$0xff] %v646
    %663 = vst [vmem:[#allocation6 + $0x20] sm:$0xff] %v647
    %664 = vst [vmem:[#allocation6 + $0x28] sm:$0xff] %v648
    %665 = vst [vmem:[#allocation6 + $0x30] sm:$0xff] %v649
    %666 = vst [vmem:[#allocation6 + $0x38] sm:$0xff] %v650
    %667 = vst [vmem:[#allocation6 + $0x40] sm:$0xff] %v651
    %668 = vst [vmem:[#allocation6 + $0x48] sm:$0xff] %v652
    %669 = vst [vmem:[#allocation6 + $0x50] sm:$0xff] %v653
    %670 = vst [vmem:[#allocation6 + $0x58] sm:$0xff] %v654
    %671 = vst [vmem:[#allocation6 + $0x60] sm:$0xff] %v655
    %672 = vst [vmem:[#allocation6 + $0x68] sm:$0xff] %v656
    %673 = vst [vmem:[#allocation6 + $0x70] sm:$0xff] %v657
    %674 = vst [vmem:[#allocation6 + $0x78] sm:$0xff] %v658
    // Predicated region
    $region14: #{tpu_custom_call.1} parent=1 // pred_check
      _
    $region15: #{tpu_custom_call.1} parent=1 // pred_check_branch
      %676 = sbr.rel (0) target = $region17
    $region16: #{tpu_custom_call.1} parent=1 // pred_region
      %678 = vsyncadd [#allocation4], 0
      %s679 = sshll.u32 [#allocation5], 4
      %s680 = int_to_ptr.vmem [resolvable:$true] %s679
      %s681 = sshll.u32 %s2, 4
      %s682 = int_to_ptr.hbm [resolvable:$true] %s681
      %687 = dma.vmem_to_hbm [thread:$0]  %s680, 2048, %s682, [#allocation4], 128, 128, 8
    $region17: #{tpu_custom_call.1} parent=1 // pred_fallthru
      _
    // Predicated region
    $region18: #{tpu_custom_call.1} parent=1 // pred_check
      _
    $region19: #{tpu_custom_call.1} parent=1 // pred_check_branch
      %689 = sbr.rel (0) target = $region21
    $region20: #{tpu_custom_call.1} parent=1 // pred_region
      %691 = vsyncadd [#allocation7], 0
      %s692 = sshll.u32 [#allocation6], 4
      %s693 = int_to_ptr.vmem [resolvable:$true] %s692
      %s694 = sshll.u32 %s3, 4
      %s695 = int_to_ptr.hbm [resolvable:$true] %s694
      %700 = dma.vmem_to_hbm [thread:$0]  %s693, 2048, %s695, [#allocation7], 128, 128, 8
    $region21: #{tpu_custom_call.1} parent=1 // pred_fallthru
      _
    // Predicated region
    $region22: #{tpu_custom_call.1} parent=1 // pred_check
      _
    $region23: #{tpu_custom_call.1} parent=1 // pred_check_branch
      %702 = sbr.rel (0) target = $region25
    $region24: #{tpu_custom_call.1} parent=1 // pred_region
      %704 = dma.done [#allocation4], 2048
    $region25: #{tpu_custom_call.1} parent=1 // pred_fallthru
      _
    // Predicated region
    $region26: #{tpu_custom_call.1} parent=1 // pred_check
      _
    $region27: #{tpu_custom_call.1} parent=1 // pred_check_branch
      %706 = sbr.rel (0) target = $region29
    $region28: #{tpu_custom_call.1} parent=1 // pred_region
      %708 = dma.done [#allocation7], 2048
    $region29: #{tpu_custom_call.1} parent=1 // pred_fallthru
      _
    %709 = vsyncpa [#allocation3], 1
    %710 = vsyncpa [#allocation4], 1
    %711 = vsyncpa [#allocation7], 1

</llo_original>
